<compile_context>
chip_gen: v7x
topology: tpu7x:2x2x1
jax: 0.10.0
libtpu: 0.0.40
codegen_flags: <defaults>
</compile_context>

<pallas_src>
import functools

import jax
import jax.numpy as jnp
from jax.experimental import pallas as pl
from jax.experimental.pallas import tpu as pltpu

_LANE = 128
_SUBLANE = 8
_TARGET_BLOCK_BYTES = 2 * 1024 * 1024   # ~2 MiB/input block: HBM-roofline plateau;
                                        # double-buffered streams fit v5e's 16 MiB
                                        # scoped-VMEM default with margin.


def _round_up(x, m):
    return (x + m - 1) // m * m


def _pick_tile_rows(n_rows, n_cols):
    """Rows per block: ~2 MiB VMEM per buffer, multiple of 8 (or == n_rows)."""
    vmem_row_bytes = _round_up(n_cols, _LANE) * 4        # f32 worst case
    cap = max(_SUBLANE,
              (_TARGET_BLOCK_BYTES // vmem_row_bytes) // _SUBLANE * _SUBLANE)
    if n_rows <= 64:
        return n_rows                                    # one tiny full-extent block
    if n_rows <= 2 * cap:
        # Split moderate inputs into ~2 tiles so v7x's second TensorCore gets work.
        return min(cap, _round_up((n_rows + 1) // 2, _SUBLANE))
    return cap


# ---------------------------------------------------------------------------
# Kernels: each grid step reduces one (tile_rows, cols) block to a small
# per-tile partial-sum block (distinct output block per step -> "parallel").
# Ragged last blocks are zeroed in-register (static row count, no HBM pad).
# ---------------------------------------------------------------------------

def _tail_mask(val, tile_rows, n_rows):
    row0 = pl.program_id(0) * tile_rows
    rid = jax.lax.broadcasted_iota(jnp.int32, val.shape, 0) + row0
    return jnp.where(rid < n_rows, val, 0.0)


def _make_abs_diff_kernel(tile_rows, n_rows):
    ragged = (n_rows % tile_rows) != 0

    def kernel(s_ref, t_ref, o_ref):
        s = s_ref[...].astype(jnp.float32)
        t = t_ref[...].astype(jnp.float32)
        val = jnp.abs(t - s)
        if ragged:
            val = _tail_mask(val, tile_rows, n_rows)
        o_ref[0] = jnp.sum(val, axis=0, keepdims=True)

    return kernel


def _make_masked_abs_diff_kernel(tile_rows, n_rows):
    ragged = (n_rows % tile_rows) != 0

    def kernel(s_ref, t_ref, m_ref, o_ref):
        s = s_ref[...].astype(jnp.float32)
        t = t_ref[...].astype(jnp.float32)
        m = m_ref[...].astype(jnp.float32)            # (tile_rows, 1), bcast over D
        val = jnp.abs(t - s) * m
        if ragged:
            val = _tail_mask(val, tile_rows, n_rows)
        o_ref[0] = jnp.sum(val, axis=0, keepdims=True)

    return kernel


def _make_seg_masked_kernel(tile_rows, n_rows):
    ragged = (n_rows % tile_rows) != 0

    def kernel(s_ref, t_ref, mg_ref, seg_ref, o_ref):
        s = s_ref[...].astype(jnp.float32)
        t = t_ref[...].astype(jnp.float32)
        recon = jnp.abs(t - s)                                   # (tile_rows, 128)
        # Per logical (n,l)-row sums via one tiny MXU matmul (MXU is idle here).
        row_sums = jnp.dot(recon, seg_ref[...],
                           preferred_element_type=jnp.float32)   # (tile_rows, g)
        val = row_sums * mg_ref[...].astype(jnp.float32)
        if ragged:
            val = _tail_mask(val, tile_rows, n_rows)
        o_ref[0] = jnp.sum(val, axis=0, keepdims=True)

    return kernel


def _make_kl_terms_kernel(tile_rows, n_rows):
    ragged = (n_rows % tile_rows) != 0

    def kernel(mu_ref, plv_ref, o_ref):
        mu = mu_ref[...].astype(jnp.float32)
        plv = plv_ref[...].astype(jnp.float32)
        val = mu * mu + jnp.exp(plv) - plv            # "-1" per element hoisted out
        if ragged:
            val = _tail_mask(val, tile_rows, n_rows)
        o_ref[0] = jnp.sum(val, axis=0, keepdims=True)

    return kernel


def _tiled_partial_sum(make_kernel, tiled_inputs, const_inputs, out_tail):
    """Run a partial-sum kernel over row-tiles and return the global f32 sum."""
    n_rows, n_cols = tiled_inputs[0].shape
    tile_rows = _pick_tile_rows(n_rows, n_cols)
    num_tiles = -(-n_rows // tile_rows)
    kernel = make_kernel(tile_rows, n_rows)
    in_specs = [pl.BlockSpec((tile_rows, x.shape[1]), lambda i: (i, 0))
                for x in tiled_inputs]
    in_specs += [pl.BlockSpec(x.shape, lambda i, nd=x.ndim: (0,) * nd)
                 for x in const_inputs]
    partials = pl.pallas_call(
        kernel,
        out_shape=jax.ShapeDtypeStruct((num_tiles, 1, out_tail), jnp.float32),
        grid_spec=pltpu.PrefetchScalarGridSpec(
            num_scalar_prefetch=0,
            grid=(num_tiles,),
            in_specs=in_specs,
            out_specs=pl.BlockSpec((1, 1, out_tail), lambda i: (i, 0, 0)),
        ),
        compiler_params=pltpu.CompilerParams(
            dimension_semantics=("parallel",)),
    )(*tiled_inputs, *const_inputs)
    return jnp.sum(partials)


# ---------------------------------------------------------------------------
# Stream reducers (choose layout + Pallas vs. plain XLA per stream).
# ---------------------------------------------------------------------------

def _sum_abs_diff(sample, target, use_pallas):
    if not use_pallas:
        return jnp.sum(jnp.abs(target.astype(jnp.float32)
                               - sample.astype(jnp.float32)))
    if sample.size % _LANE == 0:
        s2d = jnp.reshape(sample, (-1, _LANE))            # free lane-dense slab
        t2d = jnp.reshape(target, (-1, _LANE))
    else:
        # Ragged total: view as (N*L, D) rows -- no padding copy ever.
        s2d = jnp.reshape(sample, (-1, sample.shape[-1]))
        t2d = jnp.reshape(target, (-1, target.shape[-1]))
    return _tiled_partial_sum(_make_abs_diff_kernel, [s2d, t2d], [],
                              out_tail=s2d.shape[1])


def _sum_masked_abs_diff(sample, target, mask_flat, use_pallas):
    N, L, D = sample.shape
    if not use_pallas:
        recon = jnp.abs(target.astype(jnp.float32) - sample.astype(jnp.float32))
        return jnp.sum(recon * jnp.reshape(mask_flat, (N, L, 1)))
    if _LANE % D == 0 and sample.size % _LANE == 0:
        # D divides 128: g logical rows per lane-dense slab row; per-row sums via
        # a tiny MXU matmul, weighted by a (rows, g) mask -- no mask broadcast.
        g = _LANE // D
        s2d = jnp.reshape(sample, (-1, _LANE))
        t2d = jnp.reshape(target, (-1, _LANE))
        mg = jnp.reshape(mask_flat, (-1, g))
        seg = jnp.repeat(jnp.eye(g, dtype=jnp.float32), D, axis=0)   # (128, g)
        return _tiled_partial_sum(_make_seg_masked_kernel, [s2d, t2d, mg], [seg],
                                  out_tail=g)
    # General path (covers D % 128 == 0 and ragged D): tile over the (N*L, D)
    # rows and weight each row by its mask value -- never materializes an
    # (N, L, D) mask in HBM.
    s2d = jnp.reshape(sample, (N * L, D))
    t2d = jnp.reshape(target, (N * L, D))
    mcol = jnp.reshape(mask_flat, (N * L, 1))
    return _tiled_partial_sum(_make_masked_abs_diff_kernel, [s2d, t2d, mcol], [],
                              out_tail=D)


def _sum_kl_terms(mu, plv, use_pallas):
    if not use_pallas:
        mu32 = mu.astype(jnp.float32)
        plv32 = plv.astype(jnp.float32)
        return jnp.sum(mu32 * mu32 + jnp.exp(plv32) - plv32)
    if mu.size % _LANE == 0:
        mu2d = jnp.reshape(mu, (-1, _LANE))
        plv2d = jnp.reshape(plv, (-1, _LANE))
    else:
        mu2d = jnp.reshape(mu, (-1, mu.shape[-1]))
        plv2d = jnp.reshape(plv, (-1, plv.shape[-1]))
    return _tiled_partial_sum(_make_kl_terms_kernel, [mu2d, plv2d], [],
                              out_tail=mu2d.shape[1])


# ---------------------------------------------------------------------------
# Public wrapper: mirrors VAELoss.forward.
# ---------------------------------------------------------------------------

@functools.partial(jax.jit,
                   static_argnames=("if_mask", "kl_loss_weight",
                                    "nll_loss_weight", "min_pallas_elements"))
def vae_loss(sample, target_sample, post_mean, post_logvar, logvar_param,
             mask=None, if_mask=False, kl_loss_weight=1e-6, nll_loss_weight=1.0,
             min_pallas_elements=131072):
    """Pallas implementation of VAELoss.forward.

    sample, target_sample : (N, L, D)
    post_mean, post_logvar: (N, L, Dz)  (DiagonalGaussianDistribution params)
    logvar_param          : scalar learned logvar (shape () or (1,))
    mask                  : (N, L) or (N, L, 1), broadcast over D
    """
    N, L, D = sample.shape

    # Tiny streams are launch-bound: a single XLA fusion beats three pallas_calls.
    use_pallas_recon = sample.size >= min_pallas_elements
    use_pallas_kl = post_mean.size >= min_pallas_elements

    # ---- reconstruction stream: sum |t - s| (optionally mask weighted) ----
    if if_mask:
        # TODO(synk): torch's mask.repeat(1, 1, D) on a 2-D (N, L) mask has odd
        # semantics; here the mask is one value per (n, l) row broadcast over D.
        mask_flat = jnp.reshape(mask, (-1,)).astype(jnp.float32)      # (N*L,)
        recon_sum = _sum_masked_abs_diff(sample, target_sample, mask_flat,
                                         use_pallas_recon)
        nll_count = jnp.float32(D) * jnp.sum(mask_flat)
    else:
        recon_sum = _sum_abs_diff(sample, target_sample, use_pallas_recon)
        nll_count = jnp.float32(N * L * D)

    # ---- KL stream: sum (mu^2 + exp(plv) - plv), "-1" hoisted -------------
    kl_terms = _sum_kl_terms(post_mean, post_logvar, use_pallas_kl)
    kl_sum = 0.5 * (kl_terms - jnp.float32(post_mean.size))

    # ---- scalar affine glue (hoisted out of the element loops) -------------
    lv = jnp.asarray(logvar_param, jnp.float32).reshape(())
    nll_sum = jnp.exp(-lv) * recon_sum + lv * nll_count

    nll_loss = nll_sum / N
    if nll_loss_weight is None:
        weighted_nll_loss = nll_loss
    else:
        weighted_nll_loss = (nll_loss_weight * nll_sum) / N
    kl_loss = kl_sum / N
    if kl_loss_weight is None:
        weighted_kl_loss = kl_loss
    else:
        weighted_kl_loss = kl_loss * kl_loss_weight

    return dict(nll_loss=nll_loss,
                weighted_nll_loss=weighted_nll_loss,
                weighted_kl_loss=weighted_kl_loss)


# ---------------------------------------------------------------------------
# Reference (plain JAX, mirrors the torch module) + self-test
# ---------------------------------------------------------------------------

def _reference(sample, target, mu, plv, logvar, mask, if_mask,
               kl_loss_weight=1e-6, nll_loss_weight=1.0):
    N = sample.shape[0]
    lv = jnp.asarray(logvar, jnp.float32).reshape(())
    recon = jnp.abs(target - sample)
    nll = recon / jnp.exp(lv) + lv
    if if_mask:
        nll = nll * mask
    w_nll = jnp.sum(nll_loss_weight * nll) / N
    nll_l = jnp.sum(nll) / N
    kl = 0.5 * jnp.sum(mu ** 2 + jnp.exp(plv) - 1.0 - plv, axis=(1, 2))
    kl_l = jnp.sum(kl) / N
    return nll_l, w_nll, kl_l * kl_loss_weight


if __name__ == "__main__":
    key = jax.random.PRNGKey(0)

    # (N, L, D, Dz, logvar, min_pallas_elements or None for default)
    configs = [
        (2, 8, 32, 16, 0.0, 0),       # slab + seg-matmul masked path (128 % D == 0)
        (2, 8, 32, 16, 0.3, 0),       # nonzero logvar exercises the hoisted affine
        (2, 41, 128, 32, 0.1, 0),     # ragged grid tail; g=1 seg path; KL hits the
                                      # (N*L, Dz) row layout (total % 128 != 0)
        (2, 50, 24, 8, -0.2, 0),      # ragged D: row-layout recon + per-row mask col
        (2, 32, 256, 64, 0.05, 0),    # D % 128 == 0 masked path (lane-dense rows)
        (2, 8, 32, 16, 0.0, None),    # default threshold -> plain-JAX fast path
        (4, 512, 128, 32, 0.0, None), # default threshold -> Pallas recon, XLA KL
    ]

    for cfg_idx, (N, L, D, Dz, lv_val, thresh) in enumerate(configs):
        key, k1, k2, k3, k4, k5 = jax.random.split(key, 6)
        sample = jax.random.normal(k1, (N, L, D), jnp.float32)
        target = jax.random.normal(k2, (N, L, D), jnp.float32)
        post_mean = jax.random.normal(k3, (N, L, Dz), jnp.float32) * 0.5
        post_logvar = jax.random.normal(k4, (N, L, Dz), jnp.float32) * 0.1
        mask = (jax.random.uniform(k5, (N, L, 1)) > 0.3).astype(jnp.float32)
        logvar_param = jnp.array(lv_val, jnp.float32)

        kwargs = {} if thresh is None else {"min_pallas_elements": thresh}
        for if_mask in (False, True):
            out = vae_loss(sample, target, post_mean, post_logvar, logvar_param,
                           mask=mask if if_mask else None, if_mask=if_mask,
                           **kwargs)
            jax.block_until_ready(out)
            ref_nll, ref_wnll, ref_wkl = _reference(
                sample, target, post_mean, post_logvar, logvar_param, mask, if_mask)
            assert jnp.allclose(out["nll_loss"], ref_nll, rtol=2e-4, atol=1e-4), (
                cfg_idx, if_mask, "nll_loss", out["nll_loss"], ref_nll)
            assert jnp.allclose(out["weighted_nll_loss"], ref_wnll,
                                rtol=2e-4, atol=1e-4), (
                cfg_idx, if_mask, "weighted_nll_loss",
                out["weighted_nll_loss"], ref_wnll)
            assert jnp.allclose(out["weighted_kl_loss"], ref_wkl,
                                rtol=2e-4, atol=1e-4), (
                cfg_idx, if_mask, "weighted_kl_loss",
                out["weighted_kl_loss"], ref_wkl)

    print("KERNEL_OK")
</pallas_src>

<mosaic_0001>
module attributes {stable_mosaic.version = 11 : i64} {
  func.func @kernel(%arg0: i32, %arg1: memref<4x128xf32, #tpu.memory_space<vmem>>, %arg2: memref<4x128xf32, #tpu.memory_space<vmem>>, %arg3: memref<1x1x128xf32, #tpu.memory_space<vmem>>) attributes {dimension_semantics = [#tpu.dimension_semantics<parallel>], iteration_bounds = array<i64: 1>, scalar_prefetch = 0 : i64, scratch_operands = 0 : i64, tpu.core_type = #tpu.core_type<tc>, window_params = [{transform_indices = @transform_0, window_bounds = array<i64: 4, 128>}, {transform_indices = @transform_1, window_bounds = array<i64: 4, 128>}, {transform_indices = @transform_2, window_bounds = array<i64: 1, 1, 128>}]} {
    %c0 = arith.constant 0 : index
    %c0_0 = arith.constant 0 : index
    %0 = vector.load %arg1[%c0, %c0_0] : memref<4x128xf32, #tpu.memory_space<vmem>>, vector<4x128xf32>
    %c0_1 = arith.constant 0 : index
    %c0_2 = arith.constant 0 : index
    %1 = vector.load %arg2[%c0_1, %c0_2] : memref<4x128xf32, #tpu.memory_space<vmem>>, vector<4x128xf32>
    %2 = arith.subf %1, %0 : vector<4x128xf32>
    %3 = math.absf %2 : vector<4x128xf32>
    %cst = arith.constant dense<0.000000e+00> : vector<128xf32>
    %4 = vector.multi_reduction <add>, %3, %cst [0] : vector<4x128xf32> to vector<128xf32>
    %5 = vector.shape_cast %4 : vector<128xf32> to vector<1x128xf32>
    %c0_3 = arith.constant 0 : index
    %c0_4 = arith.constant 0 : index
    %c0_5 = arith.constant 0 : index
    %6 = vector.load %arg3[%c0_3, %c0_4, %c0_5] : memref<1x1x128xf32, #tpu.memory_space<vmem>>, vector<1x1x128xf32>
    %7 = vector.shape_cast %6 : vector<1x1x128xf32> to vector<1x128xf32>
    %8 = vector.shape_cast %5 : vector<1x128xf32> to vector<1x1x128xf32>
    tpu.vector_store %arg3[%c0_3, %c0_4, %c0_5], %8 {strides = array<i32>} : memref<1x1x128xf32, #tpu.memory_space<vmem>>, vector<1x1x128xf32>,
    return
  }
  func.func @transform_0(%arg0: i32) -> (i32, i32) {
    %c0_i32 = arith.constant 0 : i32
    %c0_i32_0 = arith.constant 0 : i32
    return %arg0, %c0_i32 : i32, i32
  }
  func.func @transform_1(%arg0: i32) -> (i32, i32) {
    %c0_i32 = arith.constant 0 : i32
    %c0_i32_0 = arith.constant 0 : i32
    return %arg0, %c0_i32 : i32, i32
  }
  func.func @transform_2(%arg0: i32) -> (i32, i32, i32) {
    %c0_i32 = arith.constant 0 : i32
    %c0_i32_0 = arith.constant 0 : i32
    %c0_i32_1 = arith.constant 0 : i32
    return %arg0, %c0_i32, %c0_i32_0 : i32, i32, i32
  }
}

module attributes {stable_mosaic.version = 11 : i64} {
  func.func @kernel(%arg0: i32, %arg1: memref<2x128xf32, #tpu.memory_space<vmem>>, %arg2: memref<2x128xf32, #tpu.memory_space<vmem>>, %arg3: memref<1x1x128xf32, #tpu.memory_space<vmem>>) attributes {dimension_semantics = [#tpu.dimension_semantics<parallel>], iteration_bounds = array<i64: 1>, scalar_prefetch = 0 : i64, scratch_operands = 0 : i64, tpu.core_type = #tpu.core_type<tc>, window_params = [{transform_indices = @transform_0, window_bounds = array<i64: 2, 128>}, {transform_indices = @transform_1, window_bounds = array<i64: 2, 128>}, {transform_indices = @transform_2, window_bounds = array<i64: 1, 1, 128>}]} {
    %c0 = arith.constant 0 : index
    %c0_0 = arith.constant 0 : index
    %0 = vector.load %arg1[%c0, %c0_0] : memref<2x128xf32, #tpu.memory_space<vmem>>, vector<2x128xf32>
    %c0_1 = arith.constant 0 : index
    %c0_2 = arith.constant 0 : index
    %1 = vector.load %arg2[%c0_1, %c0_2] : memref<2x128xf32, #tpu.memory_space<vmem>>, vector<2x128xf32>
    %2 = arith.mulf %0, %0 : vector<2x128xf32>
    %3 = math.exp %1 : vector<2x128xf32>
    %4 = arith.addf %2, %3 : vector<2x128xf32>
    %5 = arith.subf %4, %1 : vector<2x128xf32>
    %cst = arith.constant dense<0.000000e+00> : vector<128xf32>
    %6 = vector.multi_reduction <add>, %5, %cst [0] : vector<2x128xf32> to vector<128xf32>
    %7 = vector.shape_cast %6 : vector<128xf32> to vector<1x128xf32>
    %c0_3 = arith.constant 0 : index
    %c0_4 = arith.constant 0 : index
    %c0_5 = arith.constant 0 : index
    %8 = vector.load %arg3[%c0_3, %c0_4, %c0_5] : memref<1x1x128xf32, #tpu.memory_space<vmem>>, vector<1x1x128xf32>
    %9 = vector.shape_cast %8 : vector<1x1x128xf32> to vector<1x128xf32>
    %10 = vector.shape_cast %7 : vector<1x128xf32> to vector<1x1x128xf32>
    tpu.vector_store %arg3[%c0_3, %c0_4, %c0_5], %10 {strides = array<i32>} : memref<1x1x128xf32, #tpu.memory_space<vmem>>, vector<1x1x128xf32>,
    return
  }
  func.func @transform_0(%arg0: i32) -> (i32, i32) {
    %c0_i32 = arith.constant 0 : i32
    %c0_i32_0 = arith.constant 0 : i32
    return %arg0, %c0_i32 : i32, i32
  }
  func.func @transform_1(%arg0: i32) -> (i32, i32) {
    %c0_i32 = arith.constant 0 : i32
    %c0_i32_0 = arith.constant 0 : i32
    return %arg0, %c0_i32 : i32, i32
  }
  func.func @transform_2(%arg0: i32) -> (i32, i32, i32) {
    %c0_i32 = arith.constant 0 : i32
    %c0_i32_0 = arith.constant 0 : i32
    %c0_i32_1 = arith.constant 0 : i32
    return %arg0, %c0_i32, %c0_i32_0 : i32, i32, i32
  }
}

</mosaic_0001>

<llo_original>
// kernel: vae_loss.2
$region0: #{vae_loss.2}
  #allocation0 [shape = 'u32[]', space=smem, size = 0x4, offset = 0x4, fixed_abs, tag = 'smem constant byte address 0x4 - core index']
  #allocation1 [shape = 'u32[144,128]{1,0:T(1,128)}', space=vmem, size = 0x12000, scoped, tag = 'internal scratch']
  %s0 = inlined_call_operand.vmem [shape: f32[4,128], index: 0, kind: input, shape index: {}]
  %s1 = inlined_call_operand.vmem [shape: f32[4,128], index: 1, kind: input, shape index: {}]
  %s2 = inlined_call_operand.vmem [shape: f32[1,1,128], index: 2, kind: output, shape index: {}]
  %s3 = sld [smem:[#allocation0]]
  $region18: #{vae_loss.2} parent=0
    _
  %s5 = ssub.s32 1, %s3
  %s6 = scalar_select 0, %s5, %s3
  // Predicated region
  $region2: #{vae_loss.2} parent=0 // pred_check
    _
  $region3: #{vae_loss.2} parent=0 // pred_check_branch
    %8 = sbr.rel (0) target = $region5
  $region4: #{vae_loss.2} parent=0 // pred_region
    _
  $region5: #{vae_loss.2} parent=0 // pred_fallthru
    _
  // Predicated region
  $region6: #{vae_loss.2} parent=0 // pred_check
    _
  $region7: #{vae_loss.2} parent=0 // pred_check_branch
    %10 = sbr.rel (0) target = $region9
  $region8: #{vae_loss.2} parent=0 // pred_region
    _
  $region9: #{vae_loss.2} parent=0 // pred_fallthru
    _
  %v11 = vld [vmem:[%s0] sm:$0xf]
  %v12 = vld [vmem:[%s1] sm:$0xf]
  %v13 = vsub.f32 %v12, %v11
  %v14 = vand.u32 2147483647, %v13
  %vm15 = vcmask 1043456
  %v16 = vsel %vm15, %v14, 0.0
  %v17 = vrot.slane %v16, 4
  %v18 = vadd.f32 %v16, %v17
  %v19 = vrot.slane %v18, 2
  %v20 = vadd.f32 %v18, %v19
  %v21 = vrot.slane %v20, 1
  %v22 = vadd.f32 %v20, %v21
  %23 = vst [vmem:[%s2] sm:$0x1] %v22
  // Predicated region
  $region10: #{vae_loss.2} parent=0 // pred_check
    _
  $region11: #{vae_loss.2} parent=0 // pred_check_branch
    %25 = sbr.rel (0) target = $region13
  $region12: #{vae_loss.2} parent=0 // pred_region
    _
  $region13: #{vae_loss.2} parent=0 // pred_fallthru
    _
  // Predicated region
  $region14: #{vae_loss.2} parent=0 // pred_check
    _
  $region15: #{vae_loss.2} parent=0 // pred_check_branch
    %27 = sbr.rel (0) target = $region17
  $region16: #{vae_loss.2} parent=0 // pred_region
    _
  $region17: #{vae_loss.2} parent=0 // pred_fallthru
    _

// kernel: vae_loss.3
$region0: #{vae_loss.3}
  #allocation0 [shape = 'u32[]', space=smem, size = 0x4, offset = 0x4, fixed_abs, tag = 'smem constant byte address 0x4 - core index']
  #allocation1 [shape = 'u32[144,128]{1,0:T(1,128)}', space=vmem, size = 0x12000, scoped, tag = 'internal scratch']
  %s0 = inlined_call_operand.vmem [shape: f32[2,128], index: 0, kind: input, shape index: {}]
  %s1 = inlined_call_operand.vmem [shape: f32[2,128], index: 1, kind: input, shape index: {}]
  %s2 = inlined_call_operand.vmem [shape: f32[1,1,128], index: 2, kind: output, shape index: {}]
  %s3 = sld [smem:[#allocation0]]
  $region18: #{vae_loss.3} parent=0
    _
  %s5 = ssub.s32 1, %s3
  %s6 = scalar_select 0, %s5, %s3
  // Predicated region
  $region2: #{vae_loss.3} parent=0 // pred_check
    _
  $region3: #{vae_loss.3} parent=0 // pred_check_branch
    %8 = sbr.rel (0) target = $region5
  $region4: #{vae_loss.3} parent=0 // pred_region
    _
  $region5: #{vae_loss.3} parent=0 // pred_fallthru
    _
  // Predicated region
  $region6: #{vae_loss.3} parent=0 // pred_check
    _
  $region7: #{vae_loss.3} parent=0 // pred_check_branch
    %10 = sbr.rel (0) target = $region9
  $region8: #{vae_loss.3} parent=0 // pred_region
    _
  $region9: #{vae_loss.3} parent=0 // pred_fallthru
    _
  %v11 = vld [vmem:[%s0] sm:$0x3]
  %v12 = vld [vmem:[%s1] sm:$0x3]
  %v13 = vmul.f32 %v11, %v11
  %v14 = vmul.f32 %v12, 1.442695
  %v15 = vpow.pop %v14
  %v16 = vadd.f32 %v13, %v15
  %v17 = vsub.f32 %v16, %v12
  %vm18 = vcmask 1041408
  %v19 = vsel %vm18, %v17, 0.0
  %v20 = vrot.slane %v19, 4
  %v21 = vadd.f32 %v19, %v20
  %v22 = vrot.slane %v21, 2
  %v23 = vadd.f32 %v21, %v22
  %v24 = vrot.slane %v23, 1
  %v25 = vadd.f32 %v23, %v24
  %26 = vst [vmem:[%s2] sm:$0x1] %v25
  // Predicated region
  $region10: #{vae_loss.3} parent=0 // pred_check
    _
  $region11: #{vae_loss.3} parent=0 // pred_check_branch
    %28 = sbr.rel (0) target = $region13
  $region12: #{vae_loss.3} parent=0 // pred_region
    _
  $region13: #{vae_loss.3} parent=0 // pred_fallthru
    _
  // Predicated region
  $region14: #{vae_loss.3} parent=0 // pred_check
    _
  $region15: #{vae_loss.3} parent=0 // pred_check_branch
    %30 = sbr.rel (0) target = $region17
  $region16: #{vae_loss.3} parent=0 // pred_region
    _
  $region17: #{vae_loss.3} parent=0 // pred_fallthru
    _

</llo_original>
